<compile_context>
chip_gen: v6e
topology: v6e:2x2x1
jax: 0.10.0
libtpu: 0.0.40
codegen_flags: <defaults>
</compile_context>

<pallas_src>
import jax
import jax.numpy as jnp
from jax.experimental import pallas as pl
from jax.experimental.pallas import tpu as pltpu


def _round_up(x, m):
    return (x + m - 1) // m * m


def _detect_tensorcores_per_chip():
    """Best-effort TC-per-chip detection (v7x has 2).  Safe fallback = 1."""
    try:
        n = getattr(jax.devices()[0], "num_cores", None)
        return max(1, int(n)) if n else 1
    except Exception:
        return 1


def _choose_tile_b(B, *, max_tile_b=4096, sublane=8, num_cores=1):
    """Batch tile: sublane-aligned and as large as allowed.

    Only when the chip has >1 TensorCore (v7x) do we shrink the tile so the
    'parallel' batch axis produces >=2 grid steps to shard across cores; on
    single-TC chips extra steps are pure overhead.
    """
    if num_cores > 1:
        per_core = pl.cdiv(B, num_cores)
        tile = _round_up(min(per_core, max_tile_b), sublane)
    else:
        tile = _round_up(min(B, max_tile_b), sublane)
    return max(tile, sublane)


def _vmem_limit_bytes(tile_b, itemsize=4):
    # Lane-padded footprint: obs/latent/out double-buffered (3 slabs x 2) plus one
    # f32 intermediate slab, each (tile_b, 128) after lane padding; + headroom for
    # the tiny resident weights and compiler scratch.
    est = (2 * 3 + 1) * tile_b * 128 * itemsize + (2 << 20)
    return int(min(max(2 * est, 32 << 20), 48 << 20))


def _amp_mlp_kernel(obs_ref, lat_ref, w1o_ref, w1l_ref, b1_ref, w2_ref, b2_ref, o_ref):
    # Layer 1 with the concat fused via split weights (all-f32, MXU accumulates f32):
    #   h = relu(obs @ W1[:obs_size] + latent @ W1[obs_size:] + b1)
    h = jnp.dot(obs_ref[...], w1o_ref[...], preferred_element_type=jnp.float32)
    h = h + jnp.dot(lat_ref[...], w1l_ref[...], preferred_element_type=jnp.float32)
    h = jnp.maximum(h + b1_ref[...], 0.0)
    # Layer 2: relu((tile_b, U1) @ (U1, U2) + b2)
    y = jnp.dot(h, w2_ref[...], preferred_element_type=jnp.float32)
    y = jnp.maximum(y + b2_ref[...], 0.0)
    o_ref[...] = y.astype(o_ref.dtype)


def amp_mlp_forward(obs, latent, params, *, max_tile_b=4096, out_dtype=jnp.float32):
    """Fused AMPMLPNet forward.

    params = (w1, b1, w2, b2) with weights stored (in, out) -- i.e. the transpose of
    PyTorch's Linear.weight -- and biases shaped (1, out).  Output: (B, units[-1]).
    """
    B, obs_size = obs.shape
    B2, lat_size = latent.shape
    assert B == B2, "obs and latent must share the batch dimension"
    w1, b1, w2, b2 = params
    D = obs_size + lat_size
    assert w1.ndim == 2 and w1.shape[0] == D, (
        f"W1 must be (in={D}, out); PyTorch stores (out, in) -- transpose it. Got {w1.shape}"
    )
    U1 = w1.shape[1]
    assert w2.ndim == 2 and w2.shape[0] == U1, f"W2 must be ({U1}, out), got {w2.shape}"
    U2 = w2.shape[1]

    # Static split of W1 so concat([obs, latent]) never materializes in HBM.
    # Weights/biases are tiny and resident; casting them in the wrapper is free.
    w1_obs = w1[:obs_size].astype(jnp.float32)
    w1_lat = w1[obs_size:].astype(jnp.float32)
    w2_f = w2.astype(jnp.float32)
    b1_f = b1.reshape(1, U1).astype(jnp.float32)
    b2_f = b2.reshape(1, U2).astype(jnp.float32)

    num_cores = _detect_tensorcores_per_chip()
    tile_b = _choose_tile_b(B, max_tile_b=max_tile_b, sublane=8, num_cores=num_cores)
    grid = (pl.cdiv(B, tile_b),)  # ragged tail handled by Pallas (OOB rows dropped)

    itemsize = jnp.dtype(obs.dtype).itemsize
    flops = 2 * B * (D * U1 + U1 * U2)
    bytes_accessed = (
        (obs.size + latent.size) * itemsize
        + (w1_obs.size + w1_lat.size + w2_f.size + b1_f.size + b2_f.size) * 4
        + B * U2 * jnp.dtype(out_dtype).itemsize
    )

    out = pl.pallas_call(
        _amp_mlp_kernel,
        out_shape=jax.ShapeDtypeStruct((B, U2), out_dtype),
        grid_spec=pltpu.PrefetchScalarGridSpec(
            num_scalar_prefetch=0,
            grid=grid,
            in_specs=[
                pl.BlockSpec((tile_b, obs_size), lambda i: (i, 0)),   # obs tile (streamed)
                pl.BlockSpec((tile_b, lat_size), lambda i: (i, 0)),   # latent tile (streamed)
                pl.BlockSpec((obs_size, U1), lambda i: (0, 0)),       # W1[:obs]  resident
                pl.BlockSpec((lat_size, U1), lambda i: (0, 0)),       # W1[obs:]  resident
                pl.BlockSpec((1, U1), lambda i: (0, 0)),              # b1        resident
                pl.BlockSpec((U1, U2), lambda i: (0, 0)),             # W2        resident
                pl.BlockSpec((1, U2), lambda i: (0, 0)),              # b2        resident
            ],
            out_specs=pl.BlockSpec((tile_b, U2), lambda i: (i, 0)),
        ),
        compiler_params=pltpu.CompilerParams(
            dimension_semantics=("parallel",),          # batch axis shards across TCs on v7x
            vmem_limit_bytes=_vmem_limit_bytes(tile_b),  # covers v5e's 16 MiB default
        ),
        cost_estimate=pl.CostEstimate(
            flops=flops, transcendentals=0, bytes_accessed=bytes_accessed
        ),
    )(obs, latent, w1_obs, w1_lat, b1_f, w2_f, b2_f)

    return out


def init_amp_mlp_params(key, input_size, units, dtype=jnp.float32):
    """Deterministic synthetic parameters.

    PyTorch Linear weight shape is (out, in); we store the transpose (in, out).
    Biases are zero-initialized, matching init_params() in the module.
    """
    params = []
    in_size = input_size
    for unit in units:
        key, wk = jax.random.split(key)
        w = jax.random.normal(wk, (in_size, unit), dtype=dtype) * (1.0 / jnp.sqrt(in_size))
        b = jnp.zeros((1, unit), dtype=dtype)
        params.extend([w, b])
        in_size = unit
    return tuple(params)


def _reference_forward_f32(obs, latent, params):
    x = jnp.concatenate([obs, latent], axis=-1)
    w1, b1, w2, b2 = params
    h = jnp.maximum(x @ w1 + b1, 0.0)
    y = jnp.maximum(h @ w2 + b2, 0.0)
    return y


if __name__ == "__main__":
    # Small shapes consistent with the module's forward:
    #   obs: (B, obs_size), latent: (B, ase_latent_size), units = [64, 32]
    B = 8
    obs_size = 24
    ase_latent_size = 8
    units = [64, 32]

    key = jax.random.PRNGKey(0)
    k_obs, k_lat, k_par = jax.random.split(key, 3)

    obs = jax.random.normal(k_obs, (B, obs_size), dtype=jnp.float32)
    latent = jax.random.normal(k_lat, (B, ase_latent_size), dtype=jnp.float32)
    params = init_amp_mlp_params(k_par, obs_size + ase_latent_size, units)

    out = jax.block_until_ready(amp_mlp_forward(obs, latent, params))
    assert out.shape == (B, units[-1])
    assert out.dtype == jnp.float32

    # Activations are kept f32 end-to-end; only MXU default-precision effects remain.
    ref = _reference_forward_f32(obs, latent, params)
    assert jnp.allclose(out, ref, atol=1e-2, rtol=1e-2), "mismatch vs f32 reference"

    # Exercise the ragged-tail / multi-step-grid path (no pad, no output slice).
    B2 = 50
    k_o2, k_l2 = jax.random.split(jax.random.PRNGKey(1))
    obs2 = jax.random.normal(k_o2, (B2, obs_size), dtype=jnp.float32)
    lat2 = jax.random.normal(k_l2, (B2, ase_latent_size), dtype=jnp.float32)
    out2 = jax.block_until_ready(amp_mlp_forward(obs2, lat2, params, max_tile_b=32))
    ref2 = _reference_forward_f32(obs2, lat2, params)
    assert out2.shape == (B2, units[-1])
    assert jnp.allclose(out2, ref2, atol=1e-2, rtol=1e-2), "mismatch on ragged-tail path"

    print("KERNEL_OK")
</pallas_src>

<mosaic_0001>
module attributes {stable_mosaic.version = 11 : i64} {
  func.func @_amp_mlp_kernel(%arg0: i32, %arg1: memref<8x24xf32, #tpu.memory_space<vmem>>, %arg2: memref<8x8xf32, #tpu.memory_space<vmem>>, %arg3: memref<24x64xf32, #tpu.memory_space<vmem>>, %arg4: memref<8x64xf32, #tpu.memory_space<vmem>>, %arg5: memref<1x64xf32, #tpu.memory_space<vmem>>, %arg6: memref<64x32xf32, #tpu.memory_space<vmem>>, %arg7: memref<1x32xf32, #tpu.memory_space<vmem>>, %arg8: memref<8x32xf32, #tpu.memory_space<vmem>>) attributes {dimension_semantics = [#tpu.dimension_semantics<parallel>], iteration_bounds = array<i64: 1>, scalar_prefetch = 0 : i64, scratch_operands = 0 : i64, tpu.core_type = #tpu.core_type<tc>, window_params = [{transform_indices = @transform_0, window_bounds = array<i64: 8, 24>}, {transform_indices = @transform_1, window_bounds = array<i64: 8, 8>}, {pipeline_mode = #tpu.pipeline_mode<synchronous>, transform_indices = @transform_2, window_bounds = array<i64: 24, 64>}, {pipeline_mode = #tpu.pipeline_mode<synchronous>, transform_indices = @transform_3, window_bounds = array<i64: 8, 64>}, {pipeline_mode = #tpu.pipeline_mode<synchronous>, transform_indices = @transform_4, window_bounds = array<i64: 1, 64>}, {pipeline_mode = #tpu.pipeline_mode<synchronous>, transform_indices = @transform_5, window_bounds = array<i64: 64, 32>}, {pipeline_mode = #tpu.pipeline_mode<synchronous>, transform_indices = @transform_6, window_bounds = array<i64: 1, 32>}, {transform_indices = @transform_7, window_bounds = array<i64: 8, 32>}]} {
    %c0 = arith.constant 0 : index
    %c0_0 = arith.constant 0 : index
    %0 = vector.load %arg1[%c0, %c0_0] : memref<8x24xf32, #tpu.memory_space<vmem>>, vector<8x24xf32>
    %c0_1 = arith.constant 0 : index
    %c0_2 = arith.constant 0 : index
    %1 = vector.load %arg3[%c0_1, %c0_2] : memref<24x64xf32, #tpu.memory_space<vmem>>, vector<24x64xf32>
    %cst = arith.constant dense<0.000000e+00> : vector<8x64xf32>
    %2 = tpu.matmul %0, %1, %cst {dimension_numbers = #tpu.dot_dimension_numbers<[1], [0], [0], [1], [0, 0, 1, 1], [], []>} : vector<8x24xf32>, vector<24x64xf32>, vector<8x64xf32> -> vector<8x64xf32>
    %c0_3 = arith.constant 0 : index
    %c0_4 = arith.constant 0 : index
    %3 = vector.load %arg2[%c0_3, %c0_4] : memref<8x8xf32, #tpu.memory_space<vmem>>, vector<8x8xf32>
    %c0_5 = arith.constant 0 : index
    %c0_6 = arith.constant 0 : index
    %4 = vector.load %arg4[%c0_5, %c0_6] : memref<8x64xf32, #tpu.memory_space<vmem>>, vector<8x64xf32>
    %cst_7 = arith.constant dense<0.000000e+00> : vector<8x64xf32>
    %5 = tpu.matmul %3, %4, %cst_7 {dimension_numbers = #tpu.dot_dimension_numbers<[1], [0], [0], [1], [0, 0, 1, 1], [], []>} : vector<8x8xf32>, vector<8x64xf32>, vector<8x64xf32> -> vector<8x64xf32>
    %6 = arith.addf %2, %5 : vector<8x64xf32>
    %c0_8 = arith.constant 0 : index
    %c0_9 = arith.constant 0 : index
    %7 = vector.load %arg5[%c0_8, %c0_9] : memref<1x64xf32, #tpu.memory_space<vmem>>, vector<1x64xf32>
    %8 = vector.broadcast %7 : vector<1x64xf32> to vector<8x64xf32>
    %9 = arith.addf %6, %8 : vector<8x64xf32>
    %cst_10 = arith.constant 0.000000e+00 : f32
    %10 = vector.broadcast %cst_10 : f32 to vector<8x64xf32>
    %11 = arith.maximumf %9, %10 : vector<8x64xf32>
    %c0_11 = arith.constant 0 : index
    %c0_12 = arith.constant 0 : index
    %12 = vector.load %arg6[%c0_11, %c0_12] : memref<64x32xf32, #tpu.memory_space<vmem>>, vector<64x32xf32>
    %cst_13 = arith.constant dense<0.000000e+00> : vector<8x32xf32>
    %13 = tpu.matmul %11, %12, %cst_13 {dimension_numbers = #tpu.dot_dimension_numbers<[1], [0], [0], [1], [0, 0, 1, 1], [], []>} : vector<8x64xf32>, vector<64x32xf32>, vector<8x32xf32> -> vector<8x32xf32>
    %c0_14 = arith.constant 0 : index
    %c0_15 = arith.constant 0 : index
    %14 = vector.load %arg7[%c0_14, %c0_15] : memref<1x32xf32, #tpu.memory_space<vmem>>, vector<1x32xf32>
    %15 = vector.broadcast %14 : vector<1x32xf32> to vector<8x32xf32>
    %16 = arith.addf %13, %15 : vector<8x32xf32>
    %cst_16 = arith.constant 0.000000e+00 : f32
    %17 = vector.broadcast %cst_16 : f32 to vector<8x32xf32>
    %18 = arith.maximumf %16, %17 : vector<8x32xf32>
    %c0_17 = arith.constant 0 : index
    %c0_18 = arith.constant 0 : index
    %19 = vector.load %arg8[%c0_17, %c0_18] : memref<8x32xf32, #tpu.memory_space<vmem>>, vector<8x32xf32>
    tpu.vector_store %arg8[%c0_17, %c0_18], %18 {strides = array<i32>} : memref<8x32xf32, #tpu.memory_space<vmem>>, vector<8x32xf32>,
    return
  }
  func.func @transform_0(%arg0: i32) -> (i32, i32) {
    %c0_i32 = arith.constant 0 : i32
    %c0_i32_0 = arith.constant 0 : i32
    return %arg0, %c0_i32 : i32, i32
  }
  func.func @transform_1(%arg0: i32) -> (i32, i32) {
    %c0_i32 = arith.constant 0 : i32
    %c0_i32_0 = arith.constant 0 : i32
    return %arg0, %c0_i32 : i32, i32
  }
  func.func @transform_2(%arg0: i32) -> (i32, i32) {
    %c0_i32 = arith.constant 0 : i32
    %c0_i32_0 = arith.constant 0 : i32
    %c0_i32_1 = arith.constant 0 : i32
    return %c0_i32, %c0_i32_0 : i32, i32
  }
  func.func @transform_3(%arg0: i32) -> (i32, i32) {
    %c0_i32 = arith.constant 0 : i32
    %c0_i32_0 = arith.constant 0 : i32
    %c0_i32_1 = arith.constant 0 : i32
    return %c0_i32, %c0_i32_0 : i32, i32
  }
  func.func @transform_4(%arg0: i32) -> (i32, i32) {
    %c0_i32 = arith.constant 0 : i32
    %c0_i32_0 = arith.constant 0 : i32
    %c0_i32_1 = arith.constant 0 : i32
    return %c0_i32, %c0_i32_0 : i32, i32
  }
  func.func @transform_5(%arg0: i32) -> (i32, i32) {
    %c0_i32 = arith.constant 0 : i32
    %c0_i32_0 = arith.constant 0 : i32
    %c0_i32_1 = arith.constant 0 : i32
    return %c0_i32, %c0_i32_0 : i32, i32
  }
  func.func @transform_6(%arg0: i32) -> (i32, i32) {
    %c0_i32 = arith.constant 0 : i32
    %c0_i32_0 = arith.constant 0 : i32
    %c0_i32_1 = arith.constant 0 : i32
    return %c0_i32, %c0_i32_0 : i32, i32
  }
  func.func @transform_7(%arg0: i32) -> (i32, i32) {
    %c0_i32 = arith.constant 0 : i32
    %c0_i32_0 = arith.constant 0 : i32
    return %arg0, %c0_i32 : i32, i32
  }
}

</mosaic_0001>

<llo_original>
// kernel: tpu_custom_call.1
$region0: #{tpu_custom_call.1}
  #allocation0 [shape = 'u32[]', space=smem, size = 0x4, offset = 0x4, fixed_abs, tag = 'smem constant byte address 0x4 - core index']
  #allocation1 [shape = 'u32[144,128]{1,0:T(1,128)}', space=vmem, size = 0x12000, scoped, tag = 'internal scratch']
  %s0 = inlined_call_operand.vmem [shape: f32[8,24], index: 0, kind: input, shape index: {}]
  %s1 = inlined_call_operand.vmem [shape: f32[8,8], index: 1, kind: input, shape index: {}]
  %s2 = inlined_call_operand.vmem [shape: f32[24,64], index: 2, kind: input, shape index: {}]
  %s3 = inlined_call_operand.vmem [shape: f32[8,64], index: 3, kind: input, shape index: {}]
  %s4 = inlined_call_operand.vmem [shape: f32[1,64], index: 4, kind: input, shape index: {}]
  %s5 = inlined_call_operand.vmem [shape: f32[64,32], index: 5, kind: input, shape index: {}]
  %s6 = inlined_call_operand.vmem [shape: f32[1,32], index: 6, kind: input, shape index: {}]
  %s7 = inlined_call_operand.hbm [shape: f32[8,32], index: 7, kind: output, shape index: {}]
  %s8 = sld [smem:[#allocation0]]
  $region38: #{tpu_custom_call.1} parent=0
    _
  %s10 = ssub.s32 1, %s8
  %s11 = scalar_select 0, %s10, %s8
  $region1: #{tpu_custom_call.1} parent=0
    #allocation2 [shape = 'u8[4096]{0}', space=vmem, size = 0x1000, scoped, tag = 'output window, operand 0, single buffered']
    #allocation3 [shape = 's32[1]{0}', space=sflag, size = 0x4, scoped, tag = 'scoped memory for tpu_custom_call.1']
    %12 = vsyncpa [#allocation3], 0
    // Predicated region
    $region2: #{tpu_custom_call.1} parent=1 // pred_check
      _
    $region3: #{tpu_custom_call.1} parent=1 // pred_check_branch
      %14 = sbr.rel (0) target = $region5
    $region4: #{tpu_custom_call.1} parent=1 // pred_region
      _
    $region5: #{tpu_custom_call.1} parent=1 // pred_fallthru
      _
    // Predicated region
    $region6: #{tpu_custom_call.1} parent=1 // pred_check
      _
    $region7: #{tpu_custom_call.1} parent=1 // pred_check_branch
      %16 = sbr.rel (0) target = $region9
    $region8: #{tpu_custom_call.1} parent=1 // pred_region
      _
    $region9: #{tpu_custom_call.1} parent=1 // pred_fallthru
      _
    // Predicated region
    $region10: #{tpu_custom_call.1} parent=1 // pred_check
      _
    $region11: #{tpu_custom_call.1} parent=1 // pred_check_branch
      %18 = sbr.rel (0) target = $region13
    $region12: #{tpu_custom_call.1} parent=1 // pred_region
      _
    $region13: #{tpu_custom_call.1} parent=1 // pred_fallthru
      _
    // Predicated region
    $region14: #{tpu_custom_call.1} parent=1 // pred_check
      _
    $region15: #{tpu_custom_call.1} parent=1 // pred_check_branch
      %20 = sbr.rel (0) target = $region17
    $region16: #{tpu_custom_call.1} parent=1 // pred_region
      _
    $region17: #{tpu_custom_call.1} parent=1 // pred_fallthru
      _
    // Predicated region
    $region18: #{tpu_custom_call.1} parent=1 // pred_check
      _
    $region19: #{tpu_custom_call.1} parent=1 // pred_check_branch
      %22 = sbr.rel (0) target = $region21
    $region20: #{tpu_custom_call.1} parent=1 // pred_region
      _
    $region21: #{tpu_custom_call.1} parent=1 // pred_fallthru
      _
    // Predicated region
    $region22: #{tpu_custom_call.1} parent=1 // pred_check
      _
    $region23: #{tpu_custom_call.1} parent=1 // pred_check_branch
      %24 = sbr.rel (0) target = $region25
    $region24: #{tpu_custom_call.1} parent=1 // pred_region
      _
    $region25: #{tpu_custom_call.1} parent=1 // pred_fallthru
      _
    // Predicated region
    $region26: #{tpu_custom_call.1} parent=1 // pred_check
      _
    $region27: #{tpu_custom_call.1} parent=1 // pred_check_branch
      %26 = sbr.rel (0) target = $region29
    $region28: #{tpu_custom_call.1} parent=1 // pred_region
      _
    $region29: #{tpu_custom_call.1} parent=1 // pred_fallthru
      _
    %v27 = vld [vmem:[%s0] sm:$0xff]
    %v28 = vld [vmem:[%s2] sm:$0xff]
    %v29 = vld [vmem:[%s2 + $0x8] sm:$0xff]
    %v30 = vld [vmem:[%s2 + $0x10] sm:$0xff]
    %v31 = vld [vmem:[%s1] sm:$0xff]
    %v32 = vld [vmem:[%s3] sm:$0xff]
    %vm33 = vcmask 64512
    %v35 = vsel %vm33, %v31, 0
    %37 = vmatprep.subr.mxu0 0.0
    %38 = vmatpush1.msra.mxu0 0.0
    %39 = vmatprep.subr.mxu0 0.0
    %40 = vmatpush1.msra.mxu0 0.0
    %41 = vmatprep.subr.mxu0 0.0
    %42 = vmatpush1.msra.mxu0 0.0
    %43 = vmatprep.subr.mxu0 0.0
    %44 = vmatpush1.msra.mxu0 0.0
    %45 = vmatprep.subr.mxu0 0.0
    %46 = vmatpush1.msra.mxu0 0.0
    %47 = vmatprep.subr.mxu0 0.0
    %48 = vmatpush1.msra.mxu0 0.0
    %49 = vmatprep.subr.mxu0 0.0
    %50 = vmatpush1.msra.mxu0 0.0
    %51 = vmatprep.subr.mxu0 0.0
    %52 = vmatpush1.msra.mxu0 0.0
    %53 = vmatprep.subr.mxu0 0.0
    %54 = vmatpush1.msra.mxu0 0.0
    %55 = vmatprep.subr.mxu0 0.0
    %56 = vmatpush1.msra.mxu0 0.0
    %57 = vmatprep.subr.mxu0 0.0
    %58 = vmatpush1.msra.mxu0 0.0
    %59 = vmatprep.subr.mxu0 0.0
    %60 = vmatpush1.msra.mxu0 0.0
    %61 = vmatprep.subr.mxu0 0.0
    %62 = vmatpush1.msra.mxu0 0.0
    %63 = vmatprep.subr.mxu0 0.0
    %64 = vmatpush1.msra.mxu0 0.0
    %65 = vmatprep.subr.mxu0 0.0
    %66 = vmatpush1.msra.mxu0 0.0
    %67 = vmatprep.subr.mxu0 0.0
    %68 = vmatpush1.msra.mxu0 %v32
    %69 = vmatprep.subr.mxu0 0.0
    %70 = vmatpush2.msra.mxu0 0.0
    %71 = vmatprep.subr.mxu0 0.0
    %72 = vmatpush2.msra.mxu0 0.0
    %73 = vmatprep.subr.mxu0 0.0
    %74 = vmatpush2.msra.mxu0 0.0
    %75 = vmatprep.subr.mxu0 0.0
    %76 = vmatpush2.msra.mxu0 0.0
    %77 = vmatprep.subr.mxu0 0.0
    %78 = vmatpush2.msra.mxu0 0.0
    %79 = vmatprep.subr.mxu0 0.0
    %80 = vmatpush2.msra.mxu0 0.0
    %81 = vmatprep.subr.mxu0 0.0
    %82 = vmatpush2.msra.mxu0 0.0
    %83 = vmatprep.subr.mxu0 0.0
    %84 = vmatpush2.msra.mxu0 0.0
    %85 = vmatprep.subr.mxu0 0.0
    %86 = vmatpush2.msra.mxu0 0.0
    %87 = vmatprep.subr.mxu0 0.0
    %88 = vmatpush2.msra.mxu0 0.0
    %89 = vmatprep.subr.mxu0 0.0
    %90 = vmatpush2.msra.mxu0 0.0
    %91 = vmatprep.subr.mxu0 0.0
    %92 = vmatpush2.msra.mxu0 0.0
    %93 = vmatprep.subr.mxu0 0.0
    %94 = vmatpush2.msra.mxu0 0.0
    %95 = vmatprep.subr.mxu0 0.0
    %96 = vmatpush2.msra.mxu0 0.0
    %97 = vmatprep.subr.mxu0 0.0
    %98 = vmatpush2.msra.mxu0 0.0
    %99 = vmatprep.subr.mxu0 0.0
    %100 = vmatpush2.msra.mxu0 0.0
    %101 = vmatprep.mubr.f32.mxu0 0.0
    %102 = vmatmul.mubr.f32.gmra.mxu0 %v35
    %v103 = vpop.f32.mrf.mxu0
    %v104 = vadd.f32 0.0, %v103
    %v105 = vpop.f32.mrf.mxu0
    %106 = vdwg.mxu0
    %vm107 = vcmask 195584
    %v109 = vsel %vm107, %v27, 0
    %111 = vmatprep.subr.mxu0 0.0
    %112 = vmatpush1.msra.mxu0 0.0
    %113 = vmatprep.subr.mxu0 0.0
    %114 = vmatpush1.msra.mxu0 0.0
    %115 = vmatprep.subr.mxu0 0.0
    %116 = vmatpush1.msra.mxu0 0.0
    %117 = vmatprep.subr.mxu0 0.0
    %118 = vmatpush1.msra.mxu0 0.0
    %119 = vmatprep.subr.mxu0 0.0
    %120 = vmatpush1.msra.mxu0 0.0
    %121 = vmatprep.subr.mxu0 0.0
    %122 = vmatpush1.msra.mxu0 0.0
    %123 = vmatprep.subr.mxu0 0.0
    %124 = vmatpush1.msra.mxu0 0.0
    %125 = vmatprep.subr.mxu0 0.0
    %126 = vmatpush1.msra.mxu0 0.0
    %127 = vmatprep.subr.mxu0 0.0
    %128 = vmatpush1.msra.mxu0 0.0
    %129 = vmatprep.subr.mxu0 0.0
    %130 = vmatpush1.msra.mxu0 0.0
    %131 = vmatprep.subr.mxu0 0.0
    %132 = vmatpush1.msra.mxu0 0.0
    %133 = vmatprep.subr.mxu0 0.0
    %134 = vmatpush1.msra.mxu0 0.0
    %135 = vmatprep.subr.mxu0 0.0
    %136 = vmatpush1.msra.mxu0 0.0
    %137 = vmatprep.subr.mxu0 0.0
    %138 = vmatpush1.msra.mxu0 %v30
    %139 = vmatprep.subr.mxu0 0.0
    %140 = vmatpush1.msra.mxu0 %v29
    %141 = vmatprep.subr.mxu0 0.0
    %142 = vmatpush1.msra.mxu0 %v28
    %143 = vmatprep.subr.mxu0 0.0
    %144 = vmatpush2.msra.mxu0 0.0
    %145 = vmatprep.subr.mxu0 0.0
    %146 = vmatpush2.msra.mxu0 0.0
    %147 = vmatprep.subr.mxu0 0.0
    %148 = vmatpush2.msra.mxu0 0.0
    %149 = vmatprep.subr.mxu0 0.0
    %150 = vmatpush2.msra.mxu0 0.0
    %151 = vmatprep.subr.mxu0 0.0
    %152 = vmatpush2.msra.mxu0 0.0
    %153 = vmatprep.subr.mxu0 0.0
    %154 = vmatpush2.msra.mxu0 0.0
    %155 = vmatprep.subr.mxu0 0.0
    %156 = vmatpush2.msra.mxu0 0.0
    %157 = vmatprep.subr.mxu0 0.0
    %158 = vmatpush2.msra.mxu0 0.0
    %159 = vmatprep.subr.mxu0 0.0
    %160 = vmatpush2.msra.mxu0 0.0
    %161 = vmatprep.subr.mxu0 0.0
    %162 = vmatpush2.msra.mxu0 0.0
    %163 = vmatprep.subr.mxu0 0.0
    %164 = vmatpush2.msra.mxu0 0.0
    %165 = vmatprep.subr.mxu0 0.0
    %166 = vmatpush2.msra.mxu0 0.0
    %167 = vmatprep.subr.mxu0 0.0
    %168 = vmatpush2.msra.mxu0 0.0
    %169 = vmatprep.subr.mxu0 0.0
    %170 = vmatpush2.msra.mxu0 0.0
    %171 = vmatprep.subr.mxu0 0.0
    %172 = vmatpush2.msra.mxu0 0.0
    %173 = vmatprep.subr.mxu0 0.0
    %174 = vmatpush2.msra.mxu0 0.0
    %175 = vmatprep.mubr.f32.mxu0 0.0
    %176 = vmatmul.mubr.f32.gmra.mxu0 %v109
    %v177 = vpop.f32.mrf.mxu0
    %v178 = vadd.f32 %v104, %v177
    %v179 = vpop.f32.mrf.mxu0
    %180 = vdwg.mxu0
    %v181 = vld [vmem:[%s4] sm:$0x1]
    %v183 = vlaneseq
    %v184 = vshrl.u32 %v183, 7
    %v185 = vsub.s32 0, %v184
    %v186 = vrot.slane %v181, %v185
    %v188 = vadd.f32 %v178, %v186
    %v189 = vmax.f32 %v188, 0.0
    %v190 = vld [vmem:[%s5] sm:$0xff]
    %v191 = vld [vmem:[%s5 + $0x8] sm:$0xff]
    %v192 = vld [vmem:[%s5 + $0x10] sm:$0xff]
    %v193 = vld [vmem:[%s5 + $0x18] sm:$0xff]
    %v194 = vld [vmem:[%s5 + $0x20] sm:$0xff]
    %v195 = vld [vmem:[%s5 + $0x28] sm:$0xff]
    %v196 = vld [vmem:[%s5 + $0x30] sm:$0xff]
    %v197 = vld [vmem:[%s5 + $0x38] sm:$0xff]
    %v198 = vld [vmem:[%s6] sm:$0x1]
    %v200 = vlaneseq
    %v201 = vshrl.u32 %v200, 7
    %v202 = vsub.s32 0, %v201
    %v203 = vrot.slane %v198, %v202
    %vm205 = vcmask 523264
    %v207 = vsel %vm205, %v189, 0
    %209 = vmatprep.subr.mxu0 0.0
    %210 = vmatpush1.msra.mxu0 0.0
    %211 = vmatprep.subr.mxu0 0.0
    %212 = vmatpush1.msra.mxu0 0.0
    %213 = vmatprep.subr.mxu0 0.0
    %214 = vmatpush1.msra.mxu0 0.0
    %215 = vmatprep.subr.mxu0 0.0
    %216 = vmatpush1.msra.mxu0 0.0
    %217 = vmatprep.subr.mxu0 0.0
    %218 = vmatpush1.msra.mxu0 0.0
    %219 = vmatprep.subr.mxu0 0.0
    %220 = vmatpush1.msra.mxu0 0.0
    %221 = vmatprep.subr.mxu0 0.0
    %222 = vmatpush1.msra.mxu0 0.0
    %223 = vmatprep.subr.mxu0 0.0
    %224 = vmatpush1.msra.mxu0 0.0
    %225 = vmatprep.subr.mxu0 0.0
    %226 = vmatpush1.msra.mxu0 %v197
    %227 = vmatprep.subr.mxu0 0.0
    %228 = vmatpush1.msra.mxu0 %v196
    %229 = vmatprep.subr.mxu0 0.0
    %230 = vmatpush1.msra.mxu0 %v195
    %231 = vmatprep.subr.mxu0 0.0
    %232 = vmatpush1.msra.mxu0 %v194
    %233 = vmatprep.subr.mxu0 0.0
    %234 = vmatpush1.msra.mxu0 %v193
    %235 = vmatprep.subr.mxu0 0.0
    %236 = vmatpush1.msra.mxu0 %v192
    %237 = vmatprep.subr.mxu0 0.0
    %238 = vmatpush1.msra.mxu0 %v191
    %239 = vmatprep.subr.mxu0 0.0
    %240 = vmatpush1.msra.mxu0 %v190
    %241 = vmatprep.subr.mxu0 0.0
    %242 = vmatpush2.msra.mxu0 0.0
    %243 = vmatprep.subr.mxu0 0.0
    %244 = vmatpush2.msra.mxu0 0.0
    %245 = vmatprep.subr.mxu0 0.0
    %246 = vmatpush2.msra.mxu0 0.0
    %247 = vmatprep.subr.mxu0 0.0
    %248 = vmatpush2.msra.mxu0 0.0
    %249 = vmatprep.subr.mxu0 0.0
    %250 = vmatpush2.msra.mxu0 0.0
    %251 = vmatprep.subr.mxu0 0.0
    %252 = vmatpush2.msra.mxu0 0.0
    %253 = vmatprep.subr.mxu0 0.0
    %254 = vmatpush2.msra.mxu0 0.0
    %255 = vmatprep.subr.mxu0 0.0
    %256 = vmatpush2.msra.mxu0 0.0
    %257 = vmatprep.subr.mxu0 0.0
    %258 = vmatpush2.msra.mxu0 0.0
    %259 = vmatprep.subr.mxu0 0.0
    %260 = vmatpush2.msra.mxu0 0.0
    %261 = vmatprep.subr.mxu0 0.0
    %262 = vmatpush2.msra.mxu0 0.0
    %263 = vmatprep.subr.mxu0 0.0
    %264 = vmatpush2.msra.mxu0 0.0
    %265 = vmatprep.subr.mxu0 0.0
    %266 = vmatpush2.msra.mxu0 0.0
    %267 = vmatprep.subr.mxu0 0.0
    %268 = vmatpush2.msra.mxu0 0.0
    %269 = vmatprep.subr.mxu0 0.0
    %270 = vmatpush2.msra.mxu0 0.0
    %271 = vmatprep.subr.mxu0 0.0
    %272 = vmatpush2.msra.mxu0 0.0
    %273 = vmatprep.mubr.f32.mxu0 0.0
    %274 = vmatmul.mubr.f32.gmra.mxu0 %v207
    %v275 = vpop.f32.mrf.mxu0
    %v276 = vadd.f32 %v203, %v275
    %v277 = vpop.f32.mrf.mxu0
    %278 = vdwg.mxu0
    %v279 = vmax.f32 %v276, 0.0
    %vm280 = vcmask 261120
    %281 = vst.msk [vmem:[#allocation2] sm:$0xff] %vm280, %v279
    // Predicated region
    $region30: #{tpu_custom_call.1} parent=1 // pred_check
      _
    $region31: #{tpu_custom_call.1} parent=1 // pred_check_branch
      %283 = sbr.rel (0) target = $region33
    $region32: #{tpu_custom_call.1} parent=1 // pred_region
      %s285 = ssub.s32 128, 128
      %286 = vsyncadd [#allocation3], %s285
      %s288 = sshll.u32 [#allocation2], 4
      %s289 = int_to_ptr.vmem [resolvable:$true] %s288
      %291 = dma.vmem_to_hbm [thread:$0]  %s289, 128, %s7, [#allocation3]
    $region33: #{tpu_custom_call.1} parent=1 // pred_fallthru
      _
    // Predicated region
    $region34: #{tpu_custom_call.1} parent=1 // pred_check
      _
    $region35: #{tpu_custom_call.1} parent=1 // pred_check_branch
      %293 = sbr.rel (0) target = $region37
    $region36: #{tpu_custom_call.1} parent=1 // pred_region
      %294 = dma.done [#allocation3], 128
    $region37: #{tpu_custom_call.1} parent=1 // pred_fallthru
      _
    %295 = vsyncpa [#allocation3], 1

</llo_original>
